<compile_context>
chip_gen: v6e
topology: v6e:2x2x1
jax: 0.10.0
libtpu: 0.0.40
codegen_flags: <defaults>
</compile_context>

<pallas_src>
import jax
import jax.numpy as jnp
from jax.experimental import pallas as pl
from jax.experimental.pallas import tpu as pltpu


_LANE_CHOICES = (512, 256, 128)          # lane-dense last-dim candidates
_BLOCK_TARGET_BYTES = 4 * 1024 * 1024    # ~4 MiB blocks amortize per-step overhead
_VMEM_LIMIT_BYTES = 40 * 1024 * 1024     # 2 in + 2 out 4 MiB buffers + headroom
_SMALL_FALLBACK_BYTES = 512 * 1024       # below this, fused jnp is faster
_SUBLANE_BY_ITEMSIZE = {4: 8, 2: 16, 1: 32}   # dtype-aware native sublane tile


def _elu_math(x, ap, an):
    """Literal translation of the PyTorch forward (incl. NaN/inf semantics)."""
    positive_part = jnp.where(x > 0, x * ap, x * 0)
    negative_part = jnp.where(x < 0, x * an, x * 0)
    return positive_part + negative_part


def _round_up(v, m):
    return -(-v // m) * m


def _pick_lane(n):
    """Largest lane width in _LANE_CHOICES that divides n (prefer rows >= 8)."""
    for lane in _LANE_CHOICES:
        if n % lane == 0 and n // lane >= 8:
            return lane
    for lane in _LANE_CHOICES:
        if n % lane == 0:
            return lane
    return None


def _run_pallas_2d(x2d, ap, an, sub):
    rows, lane = x2d.shape
    dtype = x2d.dtype
    itemsize = jnp.dtype(dtype).itemsize

    # Rows per block: target ~4 MiB, but keep >= 2 grid steps when possible so
    # v7x's two TensorCores both get work along the "parallel" axis.
    tr = _BLOCK_TARGET_BYTES // (lane * itemsize)
    tr = max(sub, (tr // sub) * sub)
    tr_two_blocks = _round_up(-(-rows // 2), sub)
    tr = max(sub, min(tr, tr_two_blocks))
    if tr > rows:
        tr = rows                        # block == full dim (always legal)
    grid = (pl.cdiv(rows, tr),)          # last partial block masked by Pallas

    def kernel(x_ref, o_ref):
        o_ref[...] = _elu_math(x_ref[...], ap, an)

    n = rows * lane
    cost = pl.CostEstimate(
        flops=4 * n, transcendentals=0, bytes_accessed=2 * n * itemsize)

    return pl.pallas_call(
        kernel,
        out_shape=jax.ShapeDtypeStruct((rows, lane), dtype),
        grid_spec=pl.GridSpec(
            grid=grid,
            in_specs=[pl.BlockSpec((tr, lane), lambda i: (i, 0))],
            out_specs=pl.BlockSpec((tr, lane), lambda i: (i, 0)),
        ),
        compiler_params=pltpu.CompilerParams(
            dimension_semantics=("parallel",),
            vmem_limit_bytes=_VMEM_LIMIT_BYTES,
        ),
        cost_estimate=cost,
    )(x2d)


def enhanced_leaky_relu(x, alpha_positive=0.01, alpha_negative=1.0,
                        use_pallas=None):
    """EnhancedLeakyReLU forward. use_pallas: None = auto, True/False = force."""
    orig_shape = x.shape
    dtype = x.dtype
    n = x.size
    ap = float(alpha_positive)
    an = float(alpha_negative)

    is_float = jnp.issubdtype(dtype, jnp.floating)
    if use_pallas is None:
        use_pallas = (is_float and
                      n * jnp.dtype(dtype).itemsize >= _SMALL_FALLBACK_BYTES)
    if n == 0 or not is_float or not use_pallas:
        # Tiny / non-floating inputs: plain jnp (XLA fuses this for free).
        return _elu_math(x, ap, an)

    sub = _SUBLANE_BY_ITEMSIZE.get(jnp.dtype(dtype).itemsize, 8)
    lane = _pick_lane(n)

    if lane is not None:
        # Copy-free fast path: contiguous (free) reshape to a lane-dense 2-D
        # view, no padding and no output slice.
        out2d = _run_pallas_2d(x.reshape(-1, lane), ap, an, sub)
        return out2d.reshape(orig_shape)

    # Ragged size: pad only to the next multiple of 128 (<= 127 elements),
    # run lane-dense at 128, then slice the valid prefix back out.
    lane = 128
    padded_n = _round_up(n, lane)
    xf = jnp.pad(x.reshape(-1), (0, padded_n - n))
    out2d = _run_pallas_2d(xf.reshape(-1, lane), ap, an, sub)
    return out2d.reshape(-1)[:n].reshape(orig_shape)


if __name__ == "__main__":
    key = jax.random.PRNGKey(0)
    k1, k2 = jax.random.split(key)

    alpha_positive = 0.01
    alpha_negative = 1.0

    # 1) Module-typical small NCHW feature map, forced through the Pallas path
    #    (2048 elements -> copy-free lane-dense reshape, no pad / no slice).
    x1 = jax.random.normal(k1, (2, 4, 16, 16), dtype=jnp.float32)
    out1 = jax.block_until_ready(
        enhanced_leaky_relu(x1, alpha_positive, alpha_negative, use_pallas=True))
    ref1 = _elu_math(x1, alpha_positive, alpha_negative)
    assert out1.shape == x1.shape and out1.dtype == x1.dtype
    assert jnp.allclose(out1, ref1, atol=1e-6, rtol=1e-6)

    # 2) Ragged size (1800 elements) exercising the minimal-pad +
    #    masked-final-block path (grid of 2, last block partial).
    x2 = jax.random.normal(k2, (5, 9, 40), dtype=jnp.float32)
    out2 = jax.block_until_ready(
        enhanced_leaky_relu(x2, alpha_positive, alpha_negative, use_pallas=True))
    ref2 = _elu_math(x2, alpha_positive, alpha_negative)
    assert out2.shape == x2.shape and out2.dtype == x2.dtype
    assert jnp.allclose(out2, ref2, atol=1e-6, rtol=1e-6)

    print("KERNEL_OK")
</pallas_src>

<mosaic_0001>
module attributes {stable_mosaic.version = 11 : i64} {
  func.func @kernel(%arg0: i32, %arg1: memref<8x256xf32, #tpu.memory_space<vmem>>, %arg2: memref<8x256xf32, #tpu.memory_space<vmem>>) attributes {dimension_semantics = [#tpu.dimension_semantics<parallel>], iteration_bounds = array<i64: 1>, scalar_prefetch = 0 : i64, scratch_operands = 0 : i64, tpu.core_type = #tpu.core_type<tc>, window_params = [{transform_indices = @transform_0, window_bounds = array<i64: 8, 256>}, {transform_indices = @transform_1, window_bounds = array<i64: 8, 256>}]} {
    %c0 = arith.constant 0 : index
    %c0_0 = arith.constant 0 : index
    %0 = vector.load %arg1[%c0, %c0_0] : memref<8x256xf32, #tpu.memory_space<vmem>>, vector<8x256xf32>
    %cst = arith.constant 0.000000e+00 : f32
    %1 = vector.broadcast %cst : f32 to vector<8x256xf32>
    %2 = arith.cmpf ogt, %0, %1 : vector<8x256xf32>
    %cst_1 = arith.constant 0.00999999977 : f32
    %3 = vector.broadcast %cst_1 : f32 to vector<8x256xf32>
    %4 = arith.mulf %0, %3 : vector<8x256xf32>
    %cst_2 = arith.constant 0.000000e+00 : f32
    %5 = vector.broadcast %cst_2 : f32 to vector<8x256xf32>
    %6 = arith.mulf %0, %5 : vector<8x256xf32>
    %7 = arith.select %2, %4, %6 : vector<8x256xi1>, vector<8x256xf32>
    %cst_3 = arith.constant 0.000000e+00 : f32
    %8 = vector.broadcast %cst_3 : f32 to vector<8x256xf32>
    %9 = arith.cmpf olt, %0, %8 : vector<8x256xf32>
    %cst_4 = arith.constant 1.000000e+00 : f32
    %10 = vector.broadcast %cst_4 : f32 to vector<8x256xf32>
    %11 = arith.mulf %0, %10 : vector<8x256xf32>
    %cst_5 = arith.constant 0.000000e+00 : f32
    %12 = vector.broadcast %cst_5 : f32 to vector<8x256xf32>
    %13 = arith.mulf %0, %12 : vector<8x256xf32>
    %14 = arith.select %9, %11, %13 : vector<8x256xi1>, vector<8x256xf32>
    %15 = arith.addf %7, %14 : vector<8x256xf32>
    %c0_6 = arith.constant 0 : index
    %c0_7 = arith.constant 0 : index
    %16 = vector.load %arg2[%c0_6, %c0_7] : memref<8x256xf32, #tpu.memory_space<vmem>>, vector<8x256xf32>
    tpu.vector_store %arg2[%c0_6, %c0_7], %15 {strides = array<i32>} : memref<8x256xf32, #tpu.memory_space<vmem>>, vector<8x256xf32>,
    return
  }
  func.func @transform_0(%arg0: i32) -> (i32, i32) {
    %c0_i32 = arith.constant 0 : i32
    %c0_i32_0 = arith.constant 0 : i32
    return %arg0, %c0_i32 : i32, i32
  }
  func.func @transform_1(%arg0: i32) -> (i32, i32) {
    %c0_i32 = arith.constant 0 : i32
    %c0_i32_0 = arith.constant 0 : i32
    return %arg0, %c0_i32 : i32, i32
  }
}

</mosaic_0001>

<llo_original>
// kernel: tpu_custom_call.1
$region0: #{tpu_custom_call.1}
  #allocation0 [shape = 'u32[]', space=smem, size = 0x4, offset = 0x4, fixed_abs, tag = 'smem constant byte address 0x4 - core index']
  #allocation1 [shape = 'u32[144,128]{1,0:T(1,128)}', space=vmem, size = 0x12000, scoped, tag = 'internal scratch']
  %s0 = inlined_call_operand.hbm [shape: f32[8,256], index: 0, kind: input, shape index: {}]
  %s1 = inlined_call_operand.hbm [shape: f32[8,256], index: 1, kind: output, shape index: {}]
  %s2 = sld [smem:[#allocation0]]
  $region18: #{tpu_custom_call.1} parent=0
    _
  %s4 = ssub.s32 1, %s2
  %s5 = scalar_select 0, %s4, %s2
  $region1: #{tpu_custom_call.1} parent=0
    #allocation2 [shape = 'u8[8192]{0}', space=vmem, size = 0x2000, scoped, tag = 'input window, operand 0, single buffered']
    #allocation3 [shape = 's32[1]{0}', space=sflag, size = 0x4, scoped, tag = 'scoped memory for tpu_custom_call.1']
    #allocation4 [shape = 's32[1]{0}', space=sflag, size = 0x4, scoped, tag = 'scoped memory for tpu_custom_call.1']
    #allocation5 [shape = 'u8[8192]{0}', space=vmem, size = 0x2000, scoped, tag = 'output window, operand 0, single buffered']
    %6 = vsyncpa [#allocation3], 0
    %7 = vsyncpa [#allocation4], 0
    // Predicated region
    $region2: #{tpu_custom_call.1} parent=1 // pred_check
      _
    $region3: #{tpu_custom_call.1} parent=1 // pred_check_branch
      %9 = sbr.rel (0) target = $region5
    $region4: #{tpu_custom_call.1} parent=1 // pred_region
      %s11 = ssub.s32 256, 256
      %12 = vsyncadd [#allocation3], %s11
      %s14 = sshll.u32 [#allocation2], 4
      %s15 = int_to_ptr.vmem [resolvable:$true] %s14
      %17 = dma.hbm_to_vmem [thread:$0]  %s0, 256, %s15, [#allocation3]
    $region5: #{tpu_custom_call.1} parent=1 // pred_fallthru
      _
    // Predicated region
    $region6: #{tpu_custom_call.1} parent=1 // pred_check
      _
    $region7: #{tpu_custom_call.1} parent=1 // pred_check_branch
      %19 = sbr.rel (0) target = $region9
    $region8: #{tpu_custom_call.1} parent=1 // pred_region
      %20 = dma.done [#allocation3], 256
    $region9: #{tpu_custom_call.1} parent=1 // pred_fallthru
      _
    %v21 = vld [vmem:[#allocation2] sm:$0xff]
    %v22 = vld [vmem:[#allocation2 + $0x8] sm:$0xff]
    %vm23 = vcmp.gt.f32.partialorder %v21, 0.0
    %vm24 = vcmp.gt.f32.partialorder %v22, 0.0
    %v25 = vmul.f32 %v21, 0.01
    %v26 = vmul.f32 %v22, 0.01
    %v27 = vmul.f32 %v21, 0.0
    %v28 = vmul.f32 %v22, 0.0
    %v29 = vsel %vm23, %v25, %v27
    %v30 = vsel %vm24, %v26, %v28
    %vm31 = vcmp.lt.f32.partialorder %v21, 0.0
    %vm32 = vcmp.lt.f32.partialorder %v22, 0.0
    %v33 = vsel %vm31, %v21, %v27
    %v34 = vsel %vm32, %v22, %v28
    %v35 = vadd.f32 %v29, %v33
    %v36 = vadd.f32 %v30, %v34
    %37 = vst [vmem:[#allocation5] sm:$0xff] %v35
    %38 = vst [vmem:[#allocation5 + $0x8] sm:$0xff] %v36
    // Predicated region
    $region10: #{tpu_custom_call.1} parent=1 // pred_check
      _
    $region11: #{tpu_custom_call.1} parent=1 // pred_check_branch
      %40 = sbr.rel (0) target = $region13
    $region12: #{tpu_custom_call.1} parent=1 // pred_region
      %s42 = ssub.s32 256, 256
      %43 = vsyncadd [#allocation4], %s42
      %s45 = sshll.u32 [#allocation5], 4
      %s46 = int_to_ptr.vmem [resolvable:$true] %s45
      %48 = dma.vmem_to_hbm [thread:$0]  %s46, 256, %s1, [#allocation4]
    $region13: #{tpu_custom_call.1} parent=1 // pred_fallthru
      _
    // Predicated region
    $region14: #{tpu_custom_call.1} parent=1 // pred_check
      _
    $region15: #{tpu_custom_call.1} parent=1 // pred_check_branch
      %50 = sbr.rel (0) target = $region17
    $region16: #{tpu_custom_call.1} parent=1 // pred_region
      %51 = dma.done [#allocation4], 256
    $region17: #{tpu_custom_call.1} parent=1 // pred_fallthru
      _
    %52 = vsyncpa [#allocation3], 1
    %53 = vsyncpa [#allocation4], 1

</llo_original>
